<compile_context>
chip_gen: v5e
topology: v5e:2x2
jax: 0.10.0
libtpu: 0.0.40
codegen_flags: <defaults>
</compile_context>

<pallas_src>
import jax
import jax.numpy as jnp
import numpy as np
from jax.experimental import pallas as pl
from jax.experimental.pallas import tpu as pltpu

EPS = 1e-5
H = W = 4          # spatial size implied by fc_1 (4 * 4 * 4 = 64 features)
K = 2              # conv kernel size


# ----------------------------- Pallas kernel --------------------------------

def _fused_cnn_kernel(x_ref, w1_ref, t1_ref, w2_ref, t2_ref,
                      w3_ref, t3_ref, w4_ref, t4_ref, w5_ref, b5_ref, o_ref):
    """Whole simpleCNN forward for one batch tile; intermediates never leave VMEM."""
    h = x_ref[...]                                                     # (TB, 16)
    # conv1 + bn1 + relu  (dense per-sample map 16 -> 32, BN scale pre-folded)
    h = jnp.maximum(
        jnp.dot(h, w1_ref[...], preferred_element_type=jnp.float32) + t1_ref[...], 0.0)
    # conv2 + bn2 + relu  (32 -> 64; column order == torch.flatten NCHW)
    h = jnp.maximum(
        jnp.dot(h, w2_ref[...], preferred_element_type=jnp.float32) + t2_ref[...], 0.0)
    # fc1 + bn3 + relu  (dropout = identity in eval)
    h = jnp.maximum(
        jnp.dot(h, w3_ref[...], preferred_element_type=jnp.float32) + t3_ref[...], 0.0)
    # fc2 + bn4 + relu  (dropout = identity in eval)
    h = jnp.maximum(
        jnp.dot(h, w4_ref[...], preferred_element_type=jnp.float32) + t4_ref[...], 0.0)
    # fc3 + softmax
    y = jnp.dot(h, w5_ref[...], preferred_element_type=jnp.float32) + b5_ref[...]
    y = y - jnp.max(y, axis=1, keepdims=True)
    e = jnp.exp(y)
    inv = pl.reciprocal(jnp.sum(e, axis=1, keepdims=True), approx=True)   # EUP slot
    o_ref[...] = (e * inv).astype(o_ref.dtype)


# ------------------- one-time parameter folding (JAX glue) ------------------

def _conv_structure(cout, cin):
    """0/1 tensor S s.t. dense_map[p, q] = sum_{co,ci,kh,kw} w[co,ci,kh,kw]*S[...,p,q].

    p indexes the input  vector (ci, h_in, w_in)  of a sample,
    q indexes the output vector (co, h,    w   )  of a sample,
    with PyTorch 'same' padding for k=2 (pad 0 top/left, 1 bottom/right).
    """
    S = np.zeros((cout, cin, K, K, cin * H * W, cout * H * W), np.float32)
    for co in range(cout):
        for ci in range(cin):
            for kh in range(K):
                for kw in range(K):
                    for h in range(H):
                        for w in range(W):
                            hi, wi = h + kh, w + kw
                            if hi < H and wi < W:
                                S[co, ci, kh, kw,
                                  ci * H * W + hi * W + wi,
                                  co * H * W + h * W + w] = 1.0
    return jnp.asarray(S)


_S1 = _conv_structure(2, 1)   # (2,1,2,2,16,32)
_S2 = _conv_structure(4, 2)   # (4,2,2,2,32,64)


def _bn_scale_shift(bias, bn):
    gamma, beta, rm, rv = bn
    s = gamma / jnp.sqrt(rv + EPS)
    t = (bias - rm) * s + beta
    return s, t


def fold_params(params):
    """Fold conv/fc weights + biases + eval-mode BN into dense matrices & shifts."""
    s1, t1 = _bn_scale_shift(params["conv1_b"], params["bn1"])
    w1 = jnp.einsum("abcd,abcdpq->pq", params["conv1_w"], _S1)
    w1 = w1 * jnp.repeat(s1, H * W)[None, :]
    t1 = jnp.repeat(t1, H * W)[None, :]                      # (1, 32)

    s2, t2 = _bn_scale_shift(params["conv2_b"], params["bn2"])
    w2 = jnp.einsum("abcd,abcdpq->pq", params["conv2_w"], _S2)
    w2 = w2 * jnp.repeat(s2, H * W)[None, :]
    t2 = jnp.repeat(t2, H * W)[None, :]                      # (1, 64)

    s3, t3 = _bn_scale_shift(params["fc1_b"], params["bn3"])
    w3 = params["fc1_w"].T * s3[None, :]                     # (64, 40)

    s4, t4 = _bn_scale_shift(params["fc2_b"], params["bn4"])
    w4 = params["fc2_w"].T * s4[None, :]                     # (40, 20)

    return {
        "w1": w1, "t1": t1,
        "w2": w2, "t2": t2,
        "w3": w3, "t3": t3.reshape(1, -1),
        "w4": w4, "t4": t4.reshape(1, -1),
        "w5": params["fc3_w"].T, "b5": params["fc3_b"].reshape(1, -1),
    }


# ------------------------------ forward pass --------------------------------

def _round_up(n, m):
    return pl.cdiv(n, m) * m


def forward(folded, x, block_rows=512):
    """x: (N, 1, 4, 4) NCHW float32. Returns softmax probs (N, num_classes)."""
    N = x.shape[0]
    xf = x.reshape(N, H * W).astype(jnp.float32)             # C=1 -> (N, 16)

    tb = min(block_rows, _round_up(N, 8))                    # batch tile (mult of 8)
    n_pad = _round_up(N, tb)
    if n_pad != N:
        xf = jnp.pad(xf, ((0, n_pad - N), (0, 0)))           # zero rows are harmless

    nclass = folded["w5"].shape[1]

    def resident(arr):                                        # weights stay in VMEM
        nd = arr.ndim
        return pl.BlockSpec(arr.shape, lambda i, _nd=nd: (0,) * _nd)

    out = pl.pallas_call(
        _fused_cnn_kernel,
        out_shape=jax.ShapeDtypeStruct((n_pad, nclass), jnp.float32),
        grid=(n_pad // tb,),
        in_specs=[
            pl.BlockSpec((tb, H * W), lambda i: (i, 0)),
            resident(folded["w1"]), resident(folded["t1"]),
            resident(folded["w2"]), resident(folded["t2"]),
            resident(folded["w3"]), resident(folded["t3"]),
            resident(folded["w4"]), resident(folded["t4"]),
            resident(folded["w5"]), resident(folded["b5"]),
        ],
        out_specs=pl.BlockSpec((tb, nclass), lambda i: (i, 0)),
        compiler_params=pltpu.CompilerParams(
            dimension_semantics=("parallel",)),
    )(xf, folded["w1"], folded["t1"], folded["w2"], folded["t2"],
      folded["w3"], folded["t3"], folded["w4"], folded["t4"],
      folded["w5"], folded["b5"])
    return out[:N]


# -------------------------- parameter construction --------------------------

def bn_init(key, n):
    k1, k2, k3, k4 = jax.random.split(key, 4)
    gamma = 1.0 + 0.1 * jax.random.normal(k1, (n,), jnp.float32)
    beta = 0.1 * jax.random.normal(k2, (n,), jnp.float32)
    rm = 0.1 * jax.random.normal(k3, (n,), jnp.float32)
    rv = 1.0 + 0.1 * jax.random.uniform(k4, (n,), jnp.float32)
    return gamma, beta, rm, rv


def init_params(key, num_classes=10):
    ks = jax.random.split(key, 14)
    n = lambda k, shp, s: s * jax.random.normal(k, shp, jnp.float32)
    return {
        "conv1_w": n(ks[0], (2, 1, 2, 2), 0.5), "conv1_b": n(ks[1], (2,), 0.1),
        "bn1": bn_init(ks[2], 2),
        "conv2_w": n(ks[3], (4, 2, 2, 2), 0.5), "conv2_b": n(ks[4], (4,), 0.1),
        "bn2": bn_init(ks[5], 4),
        "fc1_w": n(ks[6], (40, 64), 0.2), "fc1_b": n(ks[7], (40,), 0.1),
        "bn3": bn_init(ks[8], 40),
        "fc2_w": n(ks[9], (20, 40), 0.2), "fc2_b": n(ks[10], (20,), 0.1),
        "bn4": bn_init(ks[11], 20),
        "fc3_w": n(ks[12], (10 if num_classes == 10 else num_classes, 20), 0.2)
                 if False else n(ks[12], (num_classes, 20), 0.2),
        "fc3_b": n(ks[13], (num_classes,), 0.1),
    }


# ------------------------- pure-JAX reference check --------------------------

def reference(params, x):
    def conv(x, w, b):
        y = jax.lax.conv_general_dilated(
            x, w, window_strides=(1, 1), padding=((0, 1), (0, 1)),
            dimension_numbers=("NCHW", "OIHW", "NCHW"))
        return y + b.reshape(1, -1, 1, 1)

    def bn_nchw(x, bn):
        g, be, rm, rv = (a.reshape(1, -1, 1, 1) for a in bn)
        return (x - rm) / jnp.sqrt(rv + EPS) * g + be

    def bn_nc(x, bn):
        g, be, rm, rv = bn
        return (x - rm) / jnp.sqrt(rv + EPS) * g + be

    y = jax.nn.relu(bn_nchw(conv(x, params["conv1_w"], params["conv1_b"]), params["bn1"]))
    y = jax.nn.relu(bn_nchw(conv(y, params["conv2_w"], params["conv2_b"]), params["bn2"]))
    f = y.reshape(x.shape[0], -1)
    h = jax.nn.relu(bn_nc(f @ params["fc1_w"].T + params["fc1_b"], params["bn3"]))
    h = jax.nn.relu(bn_nc(h @ params["fc2_w"].T + params["fc2_b"], params["bn4"]))
    return jax.nn.softmax(h @ params["fc3_w"].T + params["fc3_b"], axis=1)


if __name__ == "__main__":
    key = jax.random.PRNGKey(0)
    kp, kx1, kx2 = jax.random.split(key, 3)
    params = init_params(kp, num_classes=10)
    folded = fold_params(params)          # done once, outside the hot path

    fwd = jax.jit(forward, static_argnames=("block_rows",))

    # Primary check: the module's natural small shape (fc_1 expects 4*4*4 = 64
    # features => 1-channel 4x4 input), batch = 2.
    x = jax.random.normal(kx1, (2, 1, 4, 4), dtype=jnp.float32)
    out = jax.block_until_ready(fwd(folded, x))
    ref = jax.block_until_ready(reference(params, x))
    assert out.shape == (2, 10)
    # tolerance relaxed slightly for the approx (EUP) reciprocal in the softmax
    assert np.allclose(np.asarray(out), np.asarray(ref), rtol=2e-3, atol=2e-4), (
        "Pallas output does not match JAX reference (batch=2)")

    # Secondary check: larger batch with a small block so the grid really tiles
    # the batch axis (multiple 'parallel' grid steps).
    x2 = jax.random.normal(kx2, (64, 1, 4, 4), dtype=jnp.float32)
    out2 = jax.block_until_ready(fwd(folded, x2, block_rows=16))
    ref2 = jax.block_until_ready(reference(params, x2))
    assert np.allclose(np.asarray(out2), np.asarray(ref2), rtol=2e-3, atol=2e-4), (
        "Pallas output does not match JAX reference (batch=64, tiled grid)")

    print("KERNEL_OK")
</pallas_src>

<mosaic_0001>
module attributes {stable_mosaic.version = 11 : i64} {
  func.func @_fused_cnn_kernel(%arg0: i32, %arg1: memref<8x16xf32, #tpu.memory_space<vmem>>, %arg2: memref<16x32xf32, #tpu.memory_space<vmem>>, %arg3: memref<1x32xf32, #tpu.memory_space<vmem>>, %arg4: memref<32x64xf32, #tpu.memory_space<vmem>>, %arg5: memref<1x64xf32, #tpu.memory_space<vmem>>, %arg6: memref<64x40xf32, #tpu.memory_space<vmem>>, %arg7: memref<1x40xf32, #tpu.memory_space<vmem>>, %arg8: memref<40x20xf32, #tpu.memory_space<vmem>>, %arg9: memref<1x20xf32, #tpu.memory_space<vmem>>, %arg10: memref<20x10xf32, #tpu.memory_space<vmem>>, %arg11: memref<1x10xf32, #tpu.memory_space<vmem>>, %arg12: memref<8x10xf32, #tpu.memory_space<vmem>>) attributes {dimension_semantics = [#tpu.dimension_semantics<parallel>], iteration_bounds = array<i64: 1>, scalar_prefetch = 0 : i64, scratch_operands = 0 : i64, tpu.core_type = #tpu.core_type<tc>, window_params = [{transform_indices = @transform_0, window_bounds = array<i64: 8, 16>}, {pipeline_mode = #tpu.pipeline_mode<synchronous>, transform_indices = @transform_1, window_bounds = array<i64: 16, 32>}, {pipeline_mode = #tpu.pipeline_mode<synchronous>, transform_indices = @transform_2, window_bounds = array<i64: 1, 32>}, {pipeline_mode = #tpu.pipeline_mode<synchronous>, transform_indices = @transform_3, window_bounds = array<i64: 32, 64>}, {pipeline_mode = #tpu.pipeline_mode<synchronous>, transform_indices = @transform_4, window_bounds = array<i64: 1, 64>}, {pipeline_mode = #tpu.pipeline_mode<synchronous>, transform_indices = @transform_5, window_bounds = array<i64: 64, 40>}, {pipeline_mode = #tpu.pipeline_mode<synchronous>, transform_indices = @transform_6, window_bounds = array<i64: 1, 40>}, {pipeline_mode = #tpu.pipeline_mode<synchronous>, transform_indices = @transform_7, window_bounds = array<i64: 40, 20>}, {pipeline_mode = #tpu.pipeline_mode<synchronous>, transform_indices = @transform_8, window_bounds = array<i64: 1, 20>}, {pipeline_mode = #tpu.pipeline_mode<synchronous>, transform_indices = @transform_9, window_bounds = array<i64: 20, 10>}, {pipeline_mode = #tpu.pipeline_mode<synchronous>, transform_indices = @transform_10, window_bounds = array<i64: 1, 10>}, {transform_indices = @transform_11, window_bounds = array<i64: 8, 10>}]} {
    %c0 = arith.constant 0 : index
    %c0_0 = arith.constant 0 : index
    %0 = vector.load %arg1[%c0, %c0_0] : memref<8x16xf32, #tpu.memory_space<vmem>>, vector<8x16xf32>
    %c0_1 = arith.constant 0 : index
    %c0_2 = arith.constant 0 : index
    %1 = vector.load %arg2[%c0_1, %c0_2] : memref<16x32xf32, #tpu.memory_space<vmem>>, vector<16x32xf32>
    %cst = arith.constant dense<0.000000e+00> : vector<8x32xf32>
    %2 = tpu.matmul %0, %1, %cst {dimension_numbers = #tpu.dot_dimension_numbers<[1], [0], [0], [1], [0, 0, 1, 1], [], []>} : vector<8x16xf32>, vector<16x32xf32>, vector<8x32xf32> -> vector<8x32xf32>
    %c0_3 = arith.constant 0 : index
    %c0_4 = arith.constant 0 : index
    %3 = vector.load %arg3[%c0_3, %c0_4] : memref<1x32xf32, #tpu.memory_space<vmem>>, vector<1x32xf32>
    %4 = vector.broadcast %3 : vector<1x32xf32> to vector<8x32xf32>
    %5 = arith.addf %2, %4 : vector<8x32xf32>
    %cst_5 = arith.constant 0.000000e+00 : f32
    %6 = vector.broadcast %cst_5 : f32 to vector<8x32xf32>
    %7 = arith.maximumf %5, %6 : vector<8x32xf32>
    %c0_6 = arith.constant 0 : index
    %c0_7 = arith.constant 0 : index
    %8 = vector.load %arg4[%c0_6, %c0_7] : memref<32x64xf32, #tpu.memory_space<vmem>>, vector<32x64xf32>
    %cst_8 = arith.constant dense<0.000000e+00> : vector<8x64xf32>
    %9 = tpu.matmul %7, %8, %cst_8 {dimension_numbers = #tpu.dot_dimension_numbers<[1], [0], [0], [1], [0, 0, 1, 1], [], []>} : vector<8x32xf32>, vector<32x64xf32>, vector<8x64xf32> -> vector<8x64xf32>
    %c0_9 = arith.constant 0 : index
    %c0_10 = arith.constant 0 : index
    %10 = vector.load %arg5[%c0_9, %c0_10] : memref<1x64xf32, #tpu.memory_space<vmem>>, vector<1x64xf32>
    %11 = vector.broadcast %10 : vector<1x64xf32> to vector<8x64xf32>
    %12 = arith.addf %9, %11 : vector<8x64xf32>
    %cst_11 = arith.constant 0.000000e+00 : f32
    %13 = vector.broadcast %cst_11 : f32 to vector<8x64xf32>
    %14 = arith.maximumf %12, %13 : vector<8x64xf32>
    %c0_12 = arith.constant 0 : index
    %c0_13 = arith.constant 0 : index
    %15 = vector.load %arg6[%c0_12, %c0_13] : memref<64x40xf32, #tpu.memory_space<vmem>>, vector<64x40xf32>
    %cst_14 = arith.constant dense<0.000000e+00> : vector<8x40xf32>
    %16 = tpu.matmul %14, %15, %cst_14 {dimension_numbers = #tpu.dot_dimension_numbers<[1], [0], [0], [1], [0, 0, 1, 1], [], []>} : vector<8x64xf32>, vector<64x40xf32>, vector<8x40xf32> -> vector<8x40xf32>
    %c0_15 = arith.constant 0 : index
    %c0_16 = arith.constant 0 : index
    %17 = vector.load %arg7[%c0_15, %c0_16] : memref<1x40xf32, #tpu.memory_space<vmem>>, vector<1x40xf32>
    %18 = vector.broadcast %17 : vector<1x40xf32> to vector<8x40xf32>
    %19 = arith.addf %16, %18 : vector<8x40xf32>
    %cst_17 = arith.constant 0.000000e+00 : f32
    %20 = vector.broadcast %cst_17 : f32 to vector<8x40xf32>
    %21 = arith.maximumf %19, %20 : vector<8x40xf32>
    %c0_18 = arith.constant 0 : index
    %c0_19 = arith.constant 0 : index
    %22 = vector.load %arg8[%c0_18, %c0_19] : memref<40x20xf32, #tpu.memory_space<vmem>>, vector<40x20xf32>
    %cst_20 = arith.constant dense<0.000000e+00> : vector<8x20xf32>
    %23 = tpu.matmul %21, %22, %cst_20 {dimension_numbers = #tpu.dot_dimension_numbers<[1], [0], [0], [1], [0, 0, 1, 1], [], []>} : vector<8x40xf32>, vector<40x20xf32>, vector<8x20xf32> -> vector<8x20xf32>
    %c0_21 = arith.constant 0 : index
    %c0_22 = arith.constant 0 : index
    %24 = vector.load %arg9[%c0_21, %c0_22] : memref<1x20xf32, #tpu.memory_space<vmem>>, vector<1x20xf32>
    %25 = vector.broadcast %24 : vector<1x20xf32> to vector<8x20xf32>
    %26 = arith.addf %23, %25 : vector<8x20xf32>
    %cst_23 = arith.constant 0.000000e+00 : f32
    %27 = vector.broadcast %cst_23 : f32 to vector<8x20xf32>
    %28 = arith.maximumf %26, %27 : vector<8x20xf32>
    %c0_24 = arith.constant 0 : index
    %c0_25 = arith.constant 0 : index
    %29 = vector.load %arg10[%c0_24, %c0_25] : memref<20x10xf32, #tpu.memory_space<vmem>>, vector<20x10xf32>
    %cst_26 = arith.constant dense<0.000000e+00> : vector<8x10xf32>
    %30 = tpu.matmul %28, %29, %cst_26 {dimension_numbers = #tpu.dot_dimension_numbers<[1], [0], [0], [1], [0, 0, 1, 1], [], []>} : vector<8x20xf32>, vector<20x10xf32>, vector<8x10xf32> -> vector<8x10xf32>
    %c0_27 = arith.constant 0 : index
    %c0_28 = arith.constant 0 : index
    %31 = vector.load %arg11[%c0_27, %c0_28] : memref<1x10xf32, #tpu.memory_space<vmem>>, vector<1x10xf32>
    %32 = vector.broadcast %31 : vector<1x10xf32> to vector<8x10xf32>
    %33 = arith.addf %30, %32 : vector<8x10xf32>
    %cst_29 = arith.constant dense<0xFF800000> : vector<8xf32>
    %34 = vector.multi_reduction <maximumf>, %33, %cst_29 [1] : vector<8x10xf32> to vector<8xf32>
    %35 = vector.shape_cast %34 : vector<8xf32> to vector<8x1xf32>
    %36 = vector.broadcast %35 : vector<8x1xf32> to vector<8x10xf32>
    %37 = arith.subf %33, %36 : vector<8x10xf32>
    %38 = math.exp %37 : vector<8x10xf32>
    %cst_30 = arith.constant dense<0.000000e+00> : vector<8xf32>
    %39 = vector.multi_reduction <add>, %38, %cst_30 [1] : vector<8x10xf32> to vector<8xf32>
    %40 = vector.shape_cast %39 : vector<8xf32> to vector<8x1xf32>
    %41 = tpu.reciprocal %40 {approx = true} : vector<8x1xf32> -> vector<8x1xf32>
    %42 = vector.broadcast %41 : vector<8x1xf32> to vector<8x10xf32>
    %43 = arith.mulf %38, %42 : vector<8x10xf32>
    %c0_31 = arith.constant 0 : index
    %c0_32 = arith.constant 0 : index
    %44 = vector.load %arg12[%c0_31, %c0_32] : memref<8x10xf32, #tpu.memory_space<vmem>>, vector<8x10xf32>
    tpu.vector_store %arg12[%c0_31, %c0_32], %43 {strides = array<i32>} : memref<8x10xf32, #tpu.memory_space<vmem>>, vector<8x10xf32>,
    return
  }
  func.func @transform_0(%arg0: i32) -> (i32, i32) {
    %c0_i32 = arith.constant 0 : i32
    %c0_i32_0 = arith.constant 0 : i32
    return %arg0, %c0_i32 : i32, i32
  }
  func.func @transform_1(%arg0: i32) -> (i32, i32) {
    %c0_i32 = arith.constant 0 : i32
    %c0_i32_0 = arith.constant 0 : i32
    %c0_i32_1 = arith.constant 0 : i32
    return %c0_i32, %c0_i32_0 : i32, i32
  }
  func.func @transform_2(%arg0: i32) -> (i32, i32) {
    %c0_i32 = arith.constant 0 : i32
    %c0_i32_0 = arith.constant 0 : i32
    %c0_i32_1 = arith.constant 0 : i32
    return %c0_i32, %c0_i32_0 : i32, i32
  }
  func.func @transform_3(%arg0: i32) -> (i32, i32) {
    %c0_i32 = arith.constant 0 : i32
    %c0_i32_0 = arith.constant 0 : i32
    %c0_i32_1 = arith.constant 0 : i32
    return %c0_i32, %c0_i32_0 : i32, i32
  }
  func.func @transform_4(%arg0: i32) -> (i32, i32) {
    %c0_i32 = arith.constant 0 : i32
    %c0_i32_0 = arith.constant 0 : i32
    %c0_i32_1 = arith.constant 0 : i32
    return %c0_i32, %c0_i32_0 : i32, i32
  }
  func.func @transform_5(%arg0: i32) -> (i32, i32) {
    %c0_i32 = arith.constant 0 : i32
    %c0_i32_0 = arith.constant 0 : i32
    %c0_i32_1 = arith.constant 0 : i32
    return %c0_i32, %c0_i32_0 : i32, i32
  }
  func.func @transform_6(%arg0: i32) -> (i32, i32) {
    %c0_i32 = arith.constant 0 : i32
    %c0_i32_0 = arith.constant 0 : i32
    %c0_i32_1 = arith.constant 0 : i32
    return %c0_i32, %c0_i32_0 : i32, i32
  }
  func.func @transform_7(%arg0: i32) -> (i32, i32) {
    %c0_i32 = arith.constant 0 : i32
    %c0_i32_0 = arith.constant 0 : i32
    %c0_i32_1 = arith.constant 0 : i32
    return %c0_i32, %c0_i32_0 : i32, i32
  }
  func.func @transform_8(%arg0: i32) -> (i32, i32) {
    %c0_i32 = arith.constant 0 : i32
    %c0_i32_0 = arith.constant 0 : i32
    %c0_i32_1 = arith.constant 0 : i32
    return %c0_i32, %c0_i32_0 : i32, i32
  }
  func.func @transform_9(%arg0: i32) -> (i32, i32) {
    %c0_i32 = arith.constant 0 : i32
    %c0_i32_0 = arith.constant 0 : i32
    %c0_i32_1 = arith.constant 0 : i32
    return %c0_i32, %c0_i32_0 : i32, i32
  }
  func.func @transform_10(%arg0: i32) -> (i32, i32) {
    %c0_i32 = arith.constant 0 : i32
    %c0_i32_0 = arith.constant 0 : i32
    %c0_i32_1 = arith.constant 0 : i32
    return %c0_i32, %c0_i32_0 : i32, i32
  }
  func.func @transform_11(%arg0: i32) -> (i32, i32) {
    %c0_i32 = arith.constant 0 : i32
    %c0_i32_0 = arith.constant 0 : i32
    return %arg0, %c0_i32 : i32, i32
  }
}

</mosaic_0001>

<llo_original>
// kernel: forward.1
$region0: #{forward.1}
  #allocation0 [shape = 'u32[]', space=smem, size = 0x4, offset = 0x4, fixed_abs, tag = 'smem constant byte address 0x4 - core index']
  #allocation1 [shape = 'u32[72,128]{1,0:T(1,128)}', space=vmem, size = 0x9000, scoped, tag = 'internal scratch']
  %s0 = inlined_call_operand.vmem [shape: f32[8,16], index: 0, kind: input, shape index: {}]
  %s1 = inlined_call_operand.vmem [shape: f32[16,32], index: 1, kind: input, shape index: {}]
  %s2 = inlined_call_operand.vmem [shape: f32[1,32], index: 2, kind: input, shape index: {}]
  %s3 = inlined_call_operand.vmem [shape: f32[32,64], index: 3, kind: input, shape index: {}]
  %s4 = inlined_call_operand.vmem [shape: f32[1,64], index: 4, kind: input, shape index: {}]
  %s5 = inlined_call_operand.vmem [shape: f32[64,40], index: 5, kind: input, shape index: {}]
  %s6 = inlined_call_operand.vmem [shape: f32[1,40], index: 6, kind: input, shape index: {}]
  %s7 = inlined_call_operand.vmem [shape: f32[40,20], index: 7, kind: input, shape index: {}]
  %s8 = inlined_call_operand.vmem [shape: f32[1,20], index: 8, kind: input, shape index: {}]
  %s9 = inlined_call_operand.vmem [shape: f32[20,10], index: 9, kind: input, shape index: {}]
  %s10 = inlined_call_operand.vmem [shape: f32[1,10], index: 10, kind: input, shape index: {}]
  %s11 = inlined_call_operand.vmem [shape: f32[8,10], index: 11, kind: output, shape index: {}]
  %s12 = sld [smem:[#allocation0]]
  $region54: #{forward.1} parent=0
    _
  %s14 = ssub.s32 1, %s12
  %s15 = scalar_select 0, %s14, %s12
  // Predicated region
  $region2: #{forward.1} parent=0 // pred_check
    _
  $region3: #{forward.1} parent=0 // pred_check_branch
    %17 = sbr.rel (0) target = $region5
  $region4: #{forward.1} parent=0 // pred_region
    _
  $region5: #{forward.1} parent=0 // pred_fallthru
    _
  // Predicated region
  $region6: #{forward.1} parent=0 // pred_check
    _
  $region7: #{forward.1} parent=0 // pred_check_branch
    %19 = sbr.rel (0) target = $region9
  $region8: #{forward.1} parent=0 // pred_region
    _
  $region9: #{forward.1} parent=0 // pred_fallthru
    _
  // Predicated region
  $region10: #{forward.1} parent=0 // pred_check
    _
  $region11: #{forward.1} parent=0 // pred_check_branch
    %21 = sbr.rel (0) target = $region13
  $region12: #{forward.1} parent=0 // pred_region
    _
  $region13: #{forward.1} parent=0 // pred_fallthru
    _
  // Predicated region
  $region14: #{forward.1} parent=0 // pred_check
    _
  $region15: #{forward.1} parent=0 // pred_check_branch
    %23 = sbr.rel (0) target = $region17
  $region16: #{forward.1} parent=0 // pred_region
    _
  $region17: #{forward.1} parent=0 // pred_fallthru
    _
  // Predicated region
  $region18: #{forward.1} parent=0 // pred_check
    _
  $region19: #{forward.1} parent=0 // pred_check_branch
    %25 = sbr.rel (0) target = $region21
  $region20: #{forward.1} parent=0 // pred_region
    _
  $region21: #{forward.1} parent=0 // pred_fallthru
    _
  // Predicated region
  $region22: #{forward.1} parent=0 // pred_check
    _
  $region23: #{forward.1} parent=0 // pred_check_branch
    %27 = sbr.rel (0) target = $region25
  $region24: #{forward.1} parent=0 // pred_region
    _
  $region25: #{forward.1} parent=0 // pred_fallthru
    _
  // Predicated region
  $region26: #{forward.1} parent=0 // pred_check
    _
  $region27: #{forward.1} parent=0 // pred_check_branch
    %29 = sbr.rel (0) target = $region29
  $region28: #{forward.1} parent=0 // pred_region
    _
  $region29: #{forward.1} parent=0 // pred_fallthru
    _
  // Predicated region
  $region30: #{forward.1} parent=0 // pred_check
    _
  $region31: #{forward.1} parent=0 // pred_check_branch
    %31 = sbr.rel (0) target = $region33
  $region32: #{forward.1} parent=0 // pred_region
    _
  $region33: #{forward.1} parent=0 // pred_fallthru
    _
  // Predicated region
  $region34: #{forward.1} parent=0 // pred_check
    _
  $region35: #{forward.1} parent=0 // pred_check_branch
    %33 = sbr.rel (0) target = $region37
  $region36: #{forward.1} parent=0 // pred_region
    _
  $region37: #{forward.1} parent=0 // pred_fallthru
    _
  // Predicated region
  $region38: #{forward.1} parent=0 // pred_check
    _
  $region39: #{forward.1} parent=0 // pred_check_branch
    %35 = sbr.rel (0) target = $region41
  $region40: #{forward.1} parent=0 // pred_region
    _
  $region41: #{forward.1} parent=0 // pred_fallthru
    _
  // Predicated region
  $region42: #{forward.1} parent=0 // pred_check
    _
  $region43: #{forward.1} parent=0 // pred_check_branch
    %37 = sbr.rel (0) target = $region45
  $region44: #{forward.1} parent=0 // pred_region
    _
  $region45: #{forward.1} parent=0 // pred_fallthru
    _
  %v38 = vld [vmem:[%s0] sm:$0xff]
  %v39 = vld [vmem:[%s1] sm:$0xff]
  %v40 = vld [vmem:[%s1 + $0x8] sm:$0xff]
  %v41 = vld [vmem:[%s2] sm:$0x1]
  %v43 = vperm.slane %v41, 0
  %vm45 = vcmask 130048
  %v47 = vsel %vm45, %v38, 0
  %49 = vmatpush.msra.mxu0 0.0
  %50 = vmatpush.msra.mxu0 0.0
  %51 = vmatpush.msra.mxu0 0.0
  %52 = vmatpush.msra.mxu0 0.0
  %53 = vmatpush.msra.mxu0 0.0
  %54 = vmatpush.msra.mxu0 0.0
  %55 = vmatpush.msra.mxu0 0.0
  %56 = vmatpush.msra.mxu0 0.0
  %57 = vmatpush.msra.mxu0 0.0
  %58 = vmatpush.msra.mxu0 0.0
  %59 = vmatpush.msra.mxu0 0.0
  %60 = vmatpush.msra.mxu0 0.0
  %61 = vmatpush.msra.mxu0 0.0
  %62 = vmatpush.msra.mxu0 0.0
  %63 = vmatpush.msra.mxu0 %v40
  %64 = vmatpush.msra.mxu0 %v39
  %65 = vmatmul.f32.gmra.mxu0 %v47
  %v66 = vpop.f32.mrf.mxu0
  %v67 = vadd.f32 %v43, %v66
  %68 = vdwg.mxu0
  %v69 = vmax.f32 %v67, 0.0
  %v70 = vld [vmem:[%s3] sm:$0xff]
  %v71 = vld [vmem:[%s3 + $0x8] sm:$0xff]
  %v72 = vld [vmem:[%s3 + $0x10] sm:$0xff]
  %v73 = vld [vmem:[%s3 + $0x18] sm:$0xff]
  %v74 = vld [vmem:[%s4] sm:$0x1]
  %v76 = vperm.slane %v74, 0
  %vm78 = vcmask 261120
  %v80 = vsel %vm78, %v69, 0
  %82 = vmatpush.msra.mxu0 0.0
  %83 = vmatpush.msra.mxu0 0.0
  %84 = vmatpush.msra.mxu0 0.0
  %85 = vmatpush.msra.mxu0 0.0
  %86 = vmatpush.msra.mxu0 0.0
  %87 = vmatpush.msra.mxu0 0.0
  %88 = vmatpush.msra.mxu0 0.0
  %89 = vmatpush.msra.mxu0 0.0
  %90 = vmatpush.msra.mxu0 0.0
  %91 = vmatpush.msra.mxu0 0.0
  %92 = vmatpush.msra.mxu0 0.0
  %93 = vmatpush.msra.mxu0 0.0
  %94 = vmatpush.msra.mxu0 %v73
  %95 = vmatpush.msra.mxu0 %v72
  %96 = vmatpush.msra.mxu0 %v71
  %97 = vmatpush.msra.mxu0 %v70
  %98 = vmatmul.f32.gmra.mxu0 %v80
  %v99 = vpop.f32.mrf.mxu0
  %v100 = vadd.f32 %v76, %v99
  %101 = vdwg.mxu0
  %v102 = vmax.f32 %v100, 0.0
  %v103 = vld [vmem:[%s5] sm:$0xff]
  %v104 = vld [vmem:[%s5 + $0x8] sm:$0xff]
  %v105 = vld [vmem:[%s5 + $0x10] sm:$0xff]
  %v106 = vld [vmem:[%s5 + $0x18] sm:$0xff]
  %v107 = vld [vmem:[%s5 + $0x20] sm:$0xff]
  %v108 = vld [vmem:[%s5 + $0x28] sm:$0xff]
  %v109 = vld [vmem:[%s5 + $0x30] sm:$0xff]
  %v110 = vld [vmem:[%s5 + $0x38] sm:$0xff]
  %v111 = vld [vmem:[%s6] sm:$0x1]
  %v113 = vperm.slane %v111, 0
  %vm115 = vcmask 523264
  %v117 = vsel %vm115, %v102, 0
  %119 = vmatpush.msra.mxu0 0.0
  %120 = vmatpush.msra.mxu0 0.0
  %121 = vmatpush.msra.mxu0 0.0
  %122 = vmatpush.msra.mxu0 0.0
  %123 = vmatpush.msra.mxu0 0.0
  %124 = vmatpush.msra.mxu0 0.0
  %125 = vmatpush.msra.mxu0 0.0
  %126 = vmatpush.msra.mxu0 0.0
  %127 = vmatpush.msra.mxu0 %v110
  %128 = vmatpush.msra.mxu0 %v109
  %129 = vmatpush.msra.mxu0 %v108
  %130 = vmatpush.msra.mxu0 %v107
  %131 = vmatpush.msra.mxu0 %v106
  %132 = vmatpush.msra.mxu0 %v105
  %133 = vmatpush.msra.mxu0 %v104
  %134 = vmatpush.msra.mxu0 %v103
  %135 = vmatmul.f32.gmra.mxu0 %v117
  %v136 = vpop.f32.mrf.mxu0
  %v137 = vadd.f32 %v113, %v136
  %138 = vdwg.mxu0
  %v139 = vmax.f32 %v137, 0.0
  %v140 = vld [vmem:[%s7] sm:$0xff]
  %v141 = vld [vmem:[%s7 + $0x8] sm:$0xff]
  %v142 = vld [vmem:[%s7 + $0x10] sm:$0xff]
  %v143 = vld [vmem:[%s7 + $0x18] sm:$0xff]
  %v144 = vld [vmem:[%s7 + $0x20] sm:$0xff]
  %v145 = vld [vmem:[%s8] sm:$0x1]
  %v147 = vperm.slane %v145, 0
  %vm149 = vcmask 326656
  %v151 = vsel %vm149, %v139, 0
  %153 = vmatpush.msra.mxu0 0.0
  %154 = vmatpush.msra.mxu0 0.0
  %155 = vmatpush.msra.mxu0 0.0
  %156 = vmatpush.msra.mxu0 0.0
  %157 = vmatpush.msra.mxu0 0.0
  %158 = vmatpush.msra.mxu0 0.0
  %159 = vmatpush.msra.mxu0 0.0
  %160 = vmatpush.msra.mxu0 0.0
  %161 = vmatpush.msra.mxu0 0.0
  %162 = vmatpush.msra.mxu0 0.0
  %163 = vmatpush.msra.mxu0 0.0
  %164 = vmatpush.msra.mxu0 %v144
  %165 = vmatpush.msra.mxu0 %v143
  %166 = vmatpush.msra.mxu0 %v142
  %167 = vmatpush.msra.mxu0 %v141
  %168 = vmatpush.msra.mxu0 %v140
  %169 = vmatmul.f32.gmra.mxu0 %v151
  %v170 = vpop.f32.mrf.mxu0
  %v171 = vadd.f32 %v147, %v170
  %172 = vdwg.mxu0
  %v173 = vmax.f32 %v171, 0.0
  %v174 = vld [vmem:[%s9] sm:$0xff]
  %v175 = vld [vmem:[%s9 + $0x8] sm:$0xff]
  %v176 = vld [vmem:[%s9 + $0x10] sm:$0xf]
  %v177 = vld [vmem:[%s10] sm:$0x1]
  %v179 = vperm.slane %v177, 0
  %vm181 = vcmask 162816
  %v183 = vsel %vm181, %v173, 0
  %vm185 = vcmask 1043456
  %v187 = vsel %vm185, %v176, 0
  %189 = vmatpush.msra.mxu0 0.0
  %190 = vmatpush.msra.mxu0 0.0
  %191 = vmatpush.msra.mxu0 0.0
  %192 = vmatpush.msra.mxu0 0.0
  %193 = vmatpush.msra.mxu0 0.0
  %194 = vmatpush.msra.mxu0 0.0
  %195 = vmatpush.msra.mxu0 0.0
  %196 = vmatpush.msra.mxu0 0.0
  %197 = vmatpush.msra.mxu0 0.0
  %198 = vmatpush.msra.mxu0 0.0
  %199 = vmatpush.msra.mxu0 0.0
  %200 = vmatpush.msra.mxu0 0.0
  %201 = vmatpush.msra.mxu0 0.0
  %202 = vmatpush.msra.mxu0 %v187
  %203 = vmatpush.msra.mxu0 %v175
  %204 = vmatpush.msra.mxu0 %v174
  %205 = vmatmul.f32.gmra.mxu0 %v183
  %v206 = vpop.f32.mrf.mxu0
  %v207 = vadd.f32 %v179, %v206
  %208 = vdwg.mxu0
  %vm209 = vcmask 80896
  %v210 = vsel %vm209, %v207, -inf
  %211 = vmax.xlane.f32.xlu0 %v210
  %v212 = vpop.xlane.xlu0 %211
  %v213 = vsub.f32 %v207, %v212
  %v214 = vmul.f32 %v213, 1.442695
  %v215 = vpow.pop %v214
  %v216 = vsel %vm209, %v215, 0.0
  %217 = vadd.xlane.f32.xlu0 %v216
  %v218 = vpop.xlane.xlu0 %217
  %v219 = vrcp.pop %v218
  %v220 = vmul.f32 %v215, %v219
  %221 = vst.msk [vmem:[%s11] sm:$0xff] %vm209, %v220
  // Predicated region
  $region46: #{forward.1} parent=0 // pred_check
    _
  $region47: #{forward.1} parent=0 // pred_check_branch
    %223 = sbr.rel (0) target = $region49
  $region48: #{forward.1} parent=0 // pred_region
    _
  $region49: #{forward.1} parent=0 // pred_fallthru
    _
  // Predicated region
  $region50: #{forward.1} parent=0 // pred_check
    _
  $region51: #{forward.1} parent=0 // pred_check_branch
    %225 = sbr.rel (0) target = $region53
  $region52: #{forward.1} parent=0 // pred_region
    _
  $region53: #{forward.1} parent=0 // pred_fallthru
    _

</llo_original>
